<compile_context>
chip_gen: v5e
topology: v5e:2x2
jax: 0.10.0
libtpu: 0.0.40
codegen_flags: <defaults>
</compile_context>

<pallas_src>
import jax
import jax.numpy as jnp
from jax.experimental import pallas as pl
from jax.experimental.pallas import tpu as pltpu

EPS = 1e-5  # nn.InstanceNorm2d default


def _make_kernel(H, W, R):
    """R = rows per tile = pack * C (image-channel pairs)."""
    HW = H * W

    def kernel(x_ref, w1_ref, b1_ref, w2_ref, b2_ref, col_ref, o_ref):
        x = x_ref[0].astype(jnp.float32)      # (R, HW)  lane-dense spatial layout
        w1 = w1_ref[...]                      # (R, 9R)  bf16
        w2 = w2_ref[...]                      # (R, 9R)  bf16
        b1 = b1_ref[...]                      # (R, 1)   f32
        b2 = b2_ref[...]                      # (R, 1)   f32
        col = col_ref[...]                    # (1, HW)  int32: w index of each pixel

        # Border masks for the reflection fix-ups, built once as (1, HW) rows and
        # broadcast across sublanes at use (reused by both convs).
        flat = jax.lax.broadcasted_iota(jnp.int32, (1, HW), 1)
        is_c0 = col == 0            # w == 0
        is_cl = col == W - 1        # w == W-1
        is_r0 = flat < W            # h == 0
        is_rl = flat >= HW - W      # h == H-1

        def shift(a, delta):
            # t[..., i] = a[..., (i + delta) mod HW]  (circular, XLU rotate)
            return pltpu.roll(a, (-delta) % HW, axis=1)

        def stacked_taps(a):
            # The 9 reflection-padded 3x3 taps of `a`, stacked along the sublane
            # (contraction) axis in (dh, dw) = (-1,-1),(-1,0),...,(1,1) order,
            # i.e. tap index t == kh*3 + kw to match the weight column blocks.
            right = shift(a, 1)     # a[h, w+1] (wraps at w = W-1)
            left = shift(a, -1)     # a[h, w-1] (wraps at w = 0)
            s = [
                jnp.where(is_c0, right, left),   # dw = -1 (reflect w=-1 -> w=1)
                a,                               # dw =  0
                jnp.where(is_cl, left, right),   # dw = +1 (reflect w=W -> w=W-2)
            ]
            top, mid, bot = [], [], []
            for sv in s:
                nxt = shift(sv, W)      # sv[h+1, w] (wraps at h = H-1)
                prv = shift(sv, -W)     # sv[h-1, w] (wraps at h = 0)
                top.append(jnp.where(is_r0, nxt, prv))   # dh = -1 (reflect h=-1 -> h=1)
                mid.append(sv)                           # dh =  0
                bot.append(jnp.where(is_rl, prv, nxt))   # dh = +1 (reflect h=H -> h=H-2)
            return jnp.concatenate(top + mid + bot, axis=0)   # (9R, HW)

        def conv3x3(a, wmat, bias):
            # One K=9R MXU contraction; bf16 operands, f32 accumulation.
            taps = stacked_taps(a).astype(jnp.bfloat16)
            acc = jnp.dot(wmat, taps, preferred_element_type=jnp.float32)
            return acc + bias

        def inorm(y):
            # InstanceNorm2d (affine=False), statistics in f32.
            # Single stacked cross-lane reduce: sum and sum-of-squares together.
            inv = 1.0 / HW
            sums = jnp.sum(jnp.concatenate([y, y * y], axis=0),
                           axis=1, keepdims=True)            # (2R, 1)
            m = sums[:R] * inv
            msq = sums[R:] * inv
            var = msq - m * m          # mean << std here; f32 stats -> safe
            return (y - m) * jax.lax.rsqrt(var + EPS)

        # ReflectionPad -> Conv3x3(+bias) -> InstanceNorm -> ReLU
        y = jnp.maximum(inorm(conv3x3(x, w1, b1)), 0.0)
        # TODO(synk): Dropout(0.5) omitted because use_dropout=False in this config.
        # ReflectionPad -> Conv3x3(+bias) -> InstanceNorm
        y = inorm(conv3x3(y, w2, b2))
        # Residual
        o_ref[0] = (x + y).astype(o_ref.dtype)

    return kernel


def resnet_block(x_nchw, w1, b1, w2, b2):
    """x_nchw: (B, C, H, W) f32.  w*: (3, 3, C, C) HWIO.  b*: (C,)."""
    B, C, H, W = x_nchw.shape
    HW = H * W

    # Pack two images per grid step (fills 8 f32 sublanes at C=4) only when that
    # still leaves >= 2 grid steps, so v7x's two TensorCores both stay busy.
    pack = 2 if (B % 2 == 0 and B >= 4) else 1
    R = pack * C
    NB = B // pack

    xf = x_nchw.reshape(NB, R, HW)                      # lane-dense spatial layout

    def make_wmat(w):
        # HWIO (3,3,Cin,Cout) -> (R, 9R) bf16; column block t = kron(I_pack, w[t].T)
        # so packed images never mix channels across the image boundary.
        wt = jnp.transpose(w.reshape(9, C, C), (0, 2, 1))     # (9, Cout, Cin)
        eye = jnp.eye(pack, dtype=w.dtype)
        blocks = [jnp.kron(eye, wt[t]) for t in range(9)]     # each (R, R)
        return jnp.concatenate(blocks, axis=1).astype(jnp.bfloat16)   # (R, 9R)

    w1m = make_wmat(w1)
    w2m = make_wmat(w2)
    b1c = jnp.tile(b1.reshape(C, 1), (pack, 1)).astype(jnp.float32)   # (R, 1)
    b2c = jnp.tile(b2.reshape(C, 1), (pack, 1)).astype(jnp.float32)
    # Precomputed column (w) index of each flattened pixel, as a single (1, HW) row.
    col = (jnp.arange(HW, dtype=jnp.int32) % W).reshape(1, HW)

    out = pl.pallas_call(
        _make_kernel(H, W, R),
        out_shape=jax.ShapeDtypeStruct((NB, R, HW), x_nchw.dtype),
        grid_spec=pltpu.PrefetchScalarGridSpec(
            num_scalar_prefetch=0,
            grid=(NB,),
            in_specs=[
                pl.BlockSpec((1, R, HW), lambda b: (b, 0, 0)),
                pl.BlockSpec((R, 9 * R), lambda b: (0, 0)),
                pl.BlockSpec((R, 1), lambda b: (0, 0)),
                pl.BlockSpec((R, 9 * R), lambda b: (0, 0)),
                pl.BlockSpec((R, 1), lambda b: (0, 0)),
                pl.BlockSpec((1, HW), lambda b: (0, 0)),
            ],
            out_specs=pl.BlockSpec((1, R, HW), lambda b: (b, 0, 0)),
        ),
        compiler_params=pltpu.CompilerParams(
            dimension_semantics=("parallel",)),
    )(xf, w1m, b1c, w2m, b2c, col)

    return out.reshape(B, C, H, W)


def _reference(x_nchw, w1, b1, w2, b2):
    # Pure-JAX f32 reference of the same forward pass (correctness check).
    x = jnp.transpose(x_nchw, (0, 2, 3, 1))

    def conv(inp, w, b):
        pad = jnp.pad(inp, ((0, 0), (1, 1), (1, 1), (0, 0)), mode="reflect")
        y = jax.lax.conv_general_dilated(
            pad, w, (1, 1), "VALID",
            dimension_numbers=("NHWC", "HWIO", "NHWC"))
        return y + b

    def inorm(y):
        m = jnp.mean(y, axis=(1, 2), keepdims=True)
        v = jnp.mean((y - m) ** 2, axis=(1, 2), keepdims=True)
        return (y - m) * jax.lax.rsqrt(v + EPS)

    y = jnp.maximum(inorm(conv(x, w1, b1)), 0.0)
    y = inorm(conv(y, w2, b2))
    return jnp.transpose(x + y, (0, 3, 1, 2))


if __name__ == "__main__":
    C, H, W = 4, 16, 16
    key = jax.random.PRNGKey(0)
    k1, k2, k3, k4, k5, k6 = jax.random.split(key, 6)

    w1 = jax.random.normal(k2, (3, 3, C, C), jnp.float32) * 0.1   # HWIO
    b1 = jax.random.normal(k3, (C,), jnp.float32) * 0.1
    w2 = jax.random.normal(k4, (3, 3, C, C), jnp.float32) * 0.1
    b2 = jax.random.normal(k5, (C,), jnp.float32) * 0.1

    # Main config from the module spec (B=2 -> one image per grid step).
    x = jax.random.normal(k1, (2, C, H, W), jnp.float32)
    out = jax.block_until_ready(resnet_block(x, w1, b1, w2, b2))
    ref = jax.block_until_ready(_reference(x, w1, b1, w2, b2))
    assert out.shape == (2, C, H, W)
    # Tolerance reflects bf16 MXU operands (f32 accumulation / statistics).
    assert jnp.allclose(out, ref, atol=5e-2, rtol=5e-2), \
        float(jnp.max(jnp.abs(out - ref)))

    # Also exercise the packed (2 images / grid step, full 8-sublane) path.
    x4 = jax.random.normal(k6, (4, C, H, W), jnp.float32)
    out4 = jax.block_until_ready(resnet_block(x4, w1, b1, w2, b2))
    ref4 = jax.block_until_ready(_reference(x4, w1, b1, w2, b2))
    assert jnp.allclose(out4, ref4, atol=5e-2, rtol=5e-2), \
        float(jnp.max(jnp.abs(out4 - ref4)))

    print("KERNEL_OK")
</pallas_src>

<mosaic_0001>
module attributes {stable_mosaic.version = 11 : i64} {
  func.func @kernel(%arg0: i32, %arg1: memref<1x4x256xf32, #tpu.memory_space<vmem>>, %arg2: memref<4x36xbf16, #tpu.memory_space<vmem>>, %arg3: memref<4x1xf32, #tpu.memory_space<vmem>>, %arg4: memref<4x36xbf16, #tpu.memory_space<vmem>>, %arg5: memref<4x1xf32, #tpu.memory_space<vmem>>, %arg6: memref<1x256xi32, #tpu.memory_space<vmem>>, %arg7: memref<1x4x256xf32, #tpu.memory_space<vmem>>) attributes {dimension_semantics = [#tpu.dimension_semantics<parallel>], iteration_bounds = array<i64: 2>, scalar_prefetch = 0 : i64, scratch_operands = 0 : i64, tpu.core_type = #tpu.core_type<tc>, window_params = [{transform_indices = @transform_0, window_bounds = array<i64: 1, 4, 256>}, {pipeline_mode = #tpu.pipeline_mode<synchronous>, transform_indices = @transform_1, window_bounds = array<i64: 4, 36>}, {pipeline_mode = #tpu.pipeline_mode<synchronous>, transform_indices = @transform_2, window_bounds = array<i64: 4, 1>}, {pipeline_mode = #tpu.pipeline_mode<synchronous>, transform_indices = @transform_3, window_bounds = array<i64: 4, 36>}, {pipeline_mode = #tpu.pipeline_mode<synchronous>, transform_indices = @transform_4, window_bounds = array<i64: 4, 1>}, {pipeline_mode = #tpu.pipeline_mode<synchronous>, transform_indices = @transform_5, window_bounds = array<i64: 1, 256>}, {transform_indices = @transform_6, window_bounds = array<i64: 1, 4, 256>}]} {
    %c0 = arith.constant 0 : index
    %c0_0 = arith.constant 0 : index
    %c0_1 = arith.constant 0 : index
    %0 = vector.load %arg1[%c0, %c0_0, %c0_1] : memref<1x4x256xf32, #tpu.memory_space<vmem>>, vector<1x4x256xf32>
    %1 = vector.shape_cast %0 : vector<1x4x256xf32> to vector<4x256xf32>
    %c0_2 = arith.constant 0 : index
    %c0_3 = arith.constant 0 : index
    %2 = vector.load %arg2[%c0_2, %c0_3] : memref<4x36xbf16, #tpu.memory_space<vmem>>, vector<4x36xbf16>
    %c0_4 = arith.constant 0 : index
    %c0_5 = arith.constant 0 : index
    %3 = vector.load %arg4[%c0_4, %c0_5] : memref<4x36xbf16, #tpu.memory_space<vmem>>, vector<4x36xbf16>
    %c0_6 = arith.constant 0 : index
    %c0_7 = arith.constant 0 : index
    %4 = vector.load %arg3[%c0_6, %c0_7] : memref<4x1xf32, #tpu.memory_space<vmem>>, vector<4x1xf32>
    %c0_8 = arith.constant 0 : index
    %c0_9 = arith.constant 0 : index
    %5 = vector.load %arg5[%c0_8, %c0_9] : memref<4x1xf32, #tpu.memory_space<vmem>>, vector<4x1xf32>
    %c0_10 = arith.constant 0 : index
    %c0_11 = arith.constant 0 : index
    %6 = vector.load %arg6[%c0_10, %c0_11] : memref<1x256xi32, #tpu.memory_space<vmem>>, vector<1x256xi32>
    %7 = tpu.iota {dimensions = array<i32: 1>} : vector<1x256xi32>
    %c0_i32 = arith.constant 0 : i32
    %8 = vector.broadcast %c0_i32 : i32 to vector<1x256xi32>
    %9 = arith.cmpi eq, %6, %8 : vector<1x256xi32>
    %c15_i32 = arith.constant 15 : i32
    %10 = vector.broadcast %c15_i32 : i32 to vector<1x256xi32>
    %11 = arith.cmpi eq, %6, %10 : vector<1x256xi32>
    %c16_i32 = arith.constant 16 : i32
    %12 = vector.broadcast %c16_i32 : i32 to vector<1x256xi32>
    %13 = arith.cmpi slt, %7, %12 : vector<1x256xi32>
    %c240_i32 = arith.constant 240 : i32
    %14 = vector.broadcast %c240_i32 : i32 to vector<1x256xi32>
    %15 = arith.cmpi sge, %7, %14 : vector<1x256xi32>
    %c255_i32 = arith.constant 255 : i32
    %16 = tpu.dynamic_rotate %1 by %c255_i32 dim 1 : vector<4x256xf32>, i32 -> vector<4x256xf32>
    %c1_i32 = arith.constant 1 : i32
    %17 = tpu.dynamic_rotate %1 by %c1_i32 dim 1 : vector<4x256xf32>, i32 -> vector<4x256xf32>
    %18 = vector.shape_cast %9 : vector<1x256xi1> to vector<1x256xi1>
    %19 = vector.broadcast %18 : vector<1x256xi1> to vector<4x256xi1>
    %20 = arith.select %19, %16, %17 : vector<4x256xi1>, vector<4x256xf32>
    %21 = vector.shape_cast %11 : vector<1x256xi1> to vector<1x256xi1>
    %22 = vector.broadcast %21 : vector<1x256xi1> to vector<4x256xi1>
    %23 = arith.select %22, %17, %16 : vector<4x256xi1>, vector<4x256xf32>
    %c240_i32_12 = arith.constant 240 : i32
    %24 = tpu.dynamic_rotate %20 by %c240_i32_12 dim 1 : vector<4x256xf32>, i32 -> vector<4x256xf32>
    %c16_i32_13 = arith.constant 16 : i32
    %25 = tpu.dynamic_rotate %20 by %c16_i32_13 dim 1 : vector<4x256xf32>, i32 -> vector<4x256xf32>
    %26 = vector.shape_cast %13 : vector<1x256xi1> to vector<1x256xi1>
    %27 = vector.broadcast %26 : vector<1x256xi1> to vector<4x256xi1>
    %28 = arith.select %27, %24, %25 : vector<4x256xi1>, vector<4x256xf32>
    %29 = vector.shape_cast %15 : vector<1x256xi1> to vector<1x256xi1>
    %30 = vector.broadcast %29 : vector<1x256xi1> to vector<4x256xi1>
    %31 = arith.select %30, %25, %24 : vector<4x256xi1>, vector<4x256xf32>
    %c240_i32_14 = arith.constant 240 : i32
    %32 = tpu.dynamic_rotate %1 by %c240_i32_14 dim 1 : vector<4x256xf32>, i32 -> vector<4x256xf32>
    %c16_i32_15 = arith.constant 16 : i32
    %33 = tpu.dynamic_rotate %1 by %c16_i32_15 dim 1 : vector<4x256xf32>, i32 -> vector<4x256xf32>
    %34 = vector.shape_cast %13 : vector<1x256xi1> to vector<1x256xi1>
    %35 = vector.broadcast %34 : vector<1x256xi1> to vector<4x256xi1>
    %36 = arith.select %35, %32, %33 : vector<4x256xi1>, vector<4x256xf32>
    %37 = vector.shape_cast %15 : vector<1x256xi1> to vector<1x256xi1>
    %38 = vector.broadcast %37 : vector<1x256xi1> to vector<4x256xi1>
    %39 = arith.select %38, %33, %32 : vector<4x256xi1>, vector<4x256xf32>
    %c240_i32_16 = arith.constant 240 : i32
    %40 = tpu.dynamic_rotate %23 by %c240_i32_16 dim 1 : vector<4x256xf32>, i32 -> vector<4x256xf32>
    %c16_i32_17 = arith.constant 16 : i32
    %41 = tpu.dynamic_rotate %23 by %c16_i32_17 dim 1 : vector<4x256xf32>, i32 -> vector<4x256xf32>
    %42 = vector.shape_cast %13 : vector<1x256xi1> to vector<1x256xi1>
    %43 = vector.broadcast %42 : vector<1x256xi1> to vector<4x256xi1>
    %44 = arith.select %43, %40, %41 : vector<4x256xi1>, vector<4x256xf32>
    %45 = vector.shape_cast %15 : vector<1x256xi1> to vector<1x256xi1>
    %46 = vector.broadcast %45 : vector<1x256xi1> to vector<4x256xi1>
    %47 = arith.select %46, %41, %40 : vector<4x256xi1>, vector<4x256xf32>
    %48 = tpu.concatenate %28, %36, %44, %20, %1, %23, %31, %39, %47 in 0 : vector<4x256xf32>, vector<4x256xf32>, vector<4x256xf32>, vector<4x256xf32>, vector<4x256xf32>, vector<4x256xf32>, vector<4x256xf32>, vector<4x256xf32>, vector<4x256xf32> -> vector<36x256xf32>
    %49 = arith.truncf %48 : vector<36x256xf32> to vector<36x256xbf16>
    %cst = arith.constant dense<0.000000e+00> : vector<4x256xf32>
    %50 = tpu.matmul %2, %49, %cst {dimension_numbers = #tpu.dot_dimension_numbers<[1], [0], [0], [1], [0, 0, 1, 1], [], []>} : vector<4x36xbf16>, vector<36x256xbf16>, vector<4x256xf32> -> vector<4x256xf32>
    %51 = vector.broadcast %4 : vector<4x1xf32> to vector<4x256xf32>
    %52 = arith.addf %50, %51 : vector<4x256xf32>
    %53 = arith.mulf %52, %52 : vector<4x256xf32>
    %54 = tpu.concatenate %52, %53 in 0 : vector<4x256xf32>, vector<4x256xf32> -> vector<8x256xf32>
    %cst_18 = arith.constant dense<0.000000e+00> : vector<8xf32>
    %55 = vector.multi_reduction <add>, %54, %cst_18 [1] : vector<8x256xf32> to vector<8xf32>
    %56 = vector.shape_cast %55 : vector<8xf32> to vector<8x1xf32>
    %57 = vector.extract_strided_slice %56 {offsets = [0, 0], sizes = [4, 1], strides = [1, 1]} : vector<8x1xf32> to vector<4x1xf32>
    %cst_19 = arith.constant 3.906250e-03 : f32
    %58 = vector.broadcast %cst_19 : f32 to vector<4x1xf32>
    %59 = arith.mulf %57, %58 : vector<4x1xf32>
    %60 = vector.extract_strided_slice %56 {offsets = [4, 0], sizes = [4, 1], strides = [1, 1]} : vector<8x1xf32> to vector<4x1xf32>
    %cst_20 = arith.constant 3.906250e-03 : f32
    %61 = vector.broadcast %cst_20 : f32 to vector<4x1xf32>
    %62 = arith.mulf %60, %61 : vector<4x1xf32>
    %63 = arith.mulf %59, %59 : vector<4x1xf32>
    %64 = arith.subf %62, %63 : vector<4x1xf32>
    %65 = vector.broadcast %59 : vector<4x1xf32> to vector<4x256xf32>
    %66 = arith.subf %52, %65 : vector<4x256xf32>
    %cst_21 = arith.constant 9.99999974E-6 : f32
    %67 = vector.broadcast %cst_21 : f32 to vector<4x1xf32>
    %68 = arith.addf %64, %67 : vector<4x1xf32>
    %69 = math.rsqrt %68 : vector<4x1xf32>
    %70 = vector.broadcast %69 : vector<4x1xf32> to vector<4x256xf32>
    %71 = arith.mulf %66, %70 : vector<4x256xf32>
    %cst_22 = arith.constant 0.000000e+00 : f32
    %72 = vector.broadcast %cst_22 : f32 to vector<4x256xf32>
    %73 = arith.maximumf %71, %72 : vector<4x256xf32>
    %c255_i32_23 = arith.constant 255 : i32
    %74 = tpu.dynamic_rotate %73 by %c255_i32_23 dim 1 : vector<4x256xf32>, i32 -> vector<4x256xf32>
    %c1_i32_24 = arith.constant 1 : i32
    %75 = tpu.dynamic_rotate %73 by %c1_i32_24 dim 1 : vector<4x256xf32>, i32 -> vector<4x256xf32>
    %76 = vector.shape_cast %9 : vector<1x256xi1> to vector<1x256xi1>
    %77 = vector.broadcast %76 : vector<1x256xi1> to vector<4x256xi1>
    %78 = arith.select %77, %74, %75 : vector<4x256xi1>, vector<4x256xf32>
    %79 = vector.shape_cast %11 : vector<1x256xi1> to vector<1x256xi1>
    %80 = vector.broadcast %79 : vector<1x256xi1> to vector<4x256xi1>
    %81 = arith.select %80, %75, %74 : vector<4x256xi1>, vector<4x256xf32>
    %c240_i32_25 = arith.constant 240 : i32
    %82 = tpu.dynamic_rotate %78 by %c240_i32_25 dim 1 : vector<4x256xf32>, i32 -> vector<4x256xf32>
    %c16_i32_26 = arith.constant 16 : i32
    %83 = tpu.dynamic_rotate %78 by %c16_i32_26 dim 1 : vector<4x256xf32>, i32 -> vector<4x256xf32>
    %84 = vector.shape_cast %13 : vector<1x256xi1> to vector<1x256xi1>
    %85 = vector.broadcast %84 : vector<1x256xi1> to vector<4x256xi1>
    %86 = arith.select %85, %82, %83 : vector<4x256xi1>, vector<4x256xf32>
    %87 = vector.shape_cast %15 : vector<1x256xi1> to vector<1x256xi1>
    %88 = vector.broadcast %87 : vector<1x256xi1> to vector<4x256xi1>
    %89 = arith.select %88, %83, %82 : vector<4x256xi1>, vector<4x256xf32>
    %c240_i32_27 = arith.constant 240 : i32
    %90 = tpu.dynamic_rotate %73 by %c240_i32_27 dim 1 : vector<4x256xf32>, i32 -> vector<4x256xf32>
    %c16_i32_28 = arith.constant 16 : i32
    %91 = tpu.dynamic_rotate %73 by %c16_i32_28 dim 1 : vector<4x256xf32>, i32 -> vector<4x256xf32>
    %92 = vector.shape_cast %13 : vector<1x256xi1> to vector<1x256xi1>
    %93 = vector.broadcast %92 : vector<1x256xi1> to vector<4x256xi1>
    %94 = arith.select %93, %90, %91 : vector<4x256xi1>, vector<4x256xf32>
    %95 = vector.shape_cast %15 : vector<1x256xi1> to vector<1x256xi1>
    %96 = vector.broadcast %95 : vector<1x256xi1> to vector<4x256xi1>
    %97 = arith.select %96, %91, %90 : vector<4x256xi1>, vector<4x256xf32>
    %c240_i32_29 = arith.constant 240 : i32
    %98 = tpu.dynamic_rotate %81 by %c240_i32_29 dim 1 : vector<4x256xf32>, i32 -> vector<4x256xf32>
    %c16_i32_30 = arith.constant 16 : i32
    %99 = tpu.dynamic_rotate %81 by %c16_i32_30 dim 1 : vector<4x256xf32>, i32 -> vector<4x256xf32>
    %100 = vector.shape_cast %13 : vector<1x256xi1> to vector<1x256xi1>
    %101 = vector.broadcast %100 : vector<1x256xi1> to vector<4x256xi1>
    %102 = arith.select %101, %98, %99 : vector<4x256xi1>, vector<4x256xf32>
    %103 = vector.shape_cast %15 : vector<1x256xi1> to vector<1x256xi1>
    %104 = vector.broadcast %103 : vector<1x256xi1> to vector<4x256xi1>
    %105 = arith.select %104, %99, %98 : vector<4x256xi1>, vector<4x256xf32>
    %106 = tpu.concatenate %86, %94, %102, %78, %73, %81, %89, %97, %105 in 0 : vector<4x256xf32>, vector<4x256xf32>, vector<4x256xf32>, vector<4x256xf32>, vector<4x256xf32>, vector<4x256xf32>, vector<4x256xf32>, vector<4x256xf32>, vector<4x256xf32> -> vector<36x256xf32>
    %107 = arith.truncf %106 : vector<36x256xf32> to vector<36x256xbf16>
    %cst_31 = arith.constant dense<0.000000e+00> : vector<4x256xf32>
    %108 = tpu.matmul %3, %107, %cst_31 {dimension_numbers = #tpu.dot_dimension_numbers<[1], [0], [0], [1], [0, 0, 1, 1], [], []>} : vector<4x36xbf16>, vector<36x256xbf16>, vector<4x256xf32> -> vector<4x256xf32>
    %109 = vector.broadcast %5 : vector<4x1xf32> to vector<4x256xf32>
    %110 = arith.addf %108, %109 : vector<4x256xf32>
    %111 = arith.mulf %110, %110 : vector<4x256xf32>
    %112 = tpu.concatenate %110, %111 in 0 : vector<4x256xf32>, vector<4x256xf32> -> vector<8x256xf32>
    %cst_32 = arith.constant dense<0.000000e+00> : vector<8xf32>
    %113 = vector.multi_reduction <add>, %112, %cst_32 [1] : vector<8x256xf32> to vector<8xf32>
    %114 = vector.shape_cast %113 : vector<8xf32> to vector<8x1xf32>
    %115 = vector.extract_strided_slice %114 {offsets = [0, 0], sizes = [4, 1], strides = [1, 1]} : vector<8x1xf32> to vector<4x1xf32>
    %cst_33 = arith.constant 3.906250e-03 : f32
    %116 = vector.broadcast %cst_33 : f32 to vector<4x1xf32>
    %117 = arith.mulf %115, %116 : vector<4x1xf32>
    %118 = vector.extract_strided_slice %114 {offsets = [4, 0], sizes = [4, 1], strides = [1, 1]} : vector<8x1xf32> to vector<4x1xf32>
    %cst_34 = arith.constant 3.906250e-03 : f32
    %119 = vector.broadcast %cst_34 : f32 to vector<4x1xf32>
    %120 = arith.mulf %118, %119 : vector<4x1xf32>
    %121 = arith.mulf %117, %117 : vector<4x1xf32>
    %122 = arith.subf %120, %121 : vector<4x1xf32>
    %123 = vector.broadcast %117 : vector<4x1xf32> to vector<4x256xf32>
    %124 = arith.subf %110, %123 : vector<4x256xf32>
    %cst_35 = arith.constant 9.99999974E-6 : f32
    %125 = vector.broadcast %cst_35 : f32 to vector<4x1xf32>
    %126 = arith.addf %122, %125 : vector<4x1xf32>
    %127 = math.rsqrt %126 : vector<4x1xf32>
    %128 = vector.broadcast %127 : vector<4x1xf32> to vector<4x256xf32>
    %129 = arith.mulf %124, %128 : vector<4x256xf32>
    %130 = arith.addf %1, %129 : vector<4x256xf32>
    %c0_36 = arith.constant 0 : index
    %c0_37 = arith.constant 0 : index
    %c0_38 = arith.constant 0 : index
    %131 = vector.load %arg7[%c0_36, %c0_37, %c0_38] : memref<1x4x256xf32, #tpu.memory_space<vmem>>, vector<1x4x256xf32>
    %132 = vector.shape_cast %131 : vector<1x4x256xf32> to vector<4x256xf32>
    %133 = vector.shape_cast %130 : vector<4x256xf32> to vector<1x4x256xf32>
    tpu.vector_store %arg7[%c0_36, %c0_37, %c0_38], %133 {strides = array<i32>} : memref<1x4x256xf32, #tpu.memory_space<vmem>>, vector<1x4x256xf32>,
    return
  }
  func.func @transform_0(%arg0: i32) -> (i32, i32, i32) {
    %c0_i32 = arith.constant 0 : i32
    %c0_i32_0 = arith.constant 0 : i32
    %c0_i32_1 = arith.constant 0 : i32
    return %arg0, %c0_i32, %c0_i32_0 : i32, i32, i32
  }
  func.func @transform_1(%arg0: i32) -> (i32, i32) {
    %c0_i32 = arith.constant 0 : i32
    %c0_i32_0 = arith.constant 0 : i32
    %c0_i32_1 = arith.constant 0 : i32
    return %c0_i32, %c0_i32_0 : i32, i32
  }
  func.func @transform_2(%arg0: i32) -> (i32, i32) {
    %c0_i32 = arith.constant 0 : i32
    %c0_i32_0 = arith.constant 0 : i32
    %c0_i32_1 = arith.constant 0 : i32
    return %c0_i32, %c0_i32_0 : i32, i32
  }
  func.func @transform_3(%arg0: i32) -> (i32, i32) {
    %c0_i32 = arith.constant 0 : i32
    %c0_i32_0 = arith.constant 0 : i32
    %c0_i32_1 = arith.constant 0 : i32
    return %c0_i32, %c0_i32_0 : i32, i32
  }
  func.func @transform_4(%arg0: i32) -> (i32, i32) {
    %c0_i32 = arith.constant 0 : i32
    %c0_i32_0 = arith.constant 0 : i32
    %c0_i32_1 = arith.constant 0 : i32
    return %c0_i32, %c0_i32_0 : i32, i32
  }
  func.func @transform_5(%arg0: i32) -> (i32, i32) {
    %c0_i32 = arith.constant 0 : i32
    %c0_i32_0 = arith.constant 0 : i32
    %c0_i32_1 = arith.constant 0 : i32
    return %c0_i32, %c0_i32_0 : i32, i32
  }
  func.func @transform_6(%arg0: i32) -> (i32, i32, i32) {
    %c0_i32 = arith.constant 0 : i32
    %c0_i32_0 = arith.constant 0 : i32
    %c0_i32_1 = arith.constant 0 : i32
    return %arg0, %c0_i32, %c0_i32_0 : i32, i32, i32
  }
}

</mosaic_0001>

<llo_original>
// kernel: tpu_custom_call.1
$region0: #{tpu_custom_call.1}
  #allocation0 [shape = 'u32[]', space=smem, size = 0x4, offset = 0x4, fixed_abs, tag = 'smem constant byte address 0x4 - core index']
  #allocation1 [shape = 'u32[72,128]{1,0:T(1,128)}', space=vmem, size = 0x9000, scoped, tag = 'internal scratch']
  %s0 = inlined_call_operand.hbm [shape: f32[2,4,256], index: 0, kind: input, shape index: {}]
  %s1 = inlined_call_operand.vmem [shape: bf16[4,36], index: 1, kind: input, shape index: {}]
  %s2 = inlined_call_operand.vmem [shape: f32[4,1], index: 2, kind: input, shape index: {}]
  %s3 = inlined_call_operand.vmem [shape: bf16[4,36], index: 3, kind: input, shape index: {}]
  %s4 = inlined_call_operand.vmem [shape: f32[4,1], index: 4, kind: input, shape index: {}]
  %s5 = inlined_call_operand.vmem [shape: s32[1,256], index: 5, kind: input, shape index: {}]
  %s6 = inlined_call_operand.hbm [shape: f32[2,4,256], index: 6, kind: output, shape index: {}]
  %s7 = sld [smem:[#allocation0]]
  $region61: #{tpu_custom_call.1} parent=0
    _
  %s9 = ssub.s32 1, %s7
  %s10 = scalar_select 0, %s9, %s7
  $region1: #{tpu_custom_call.1} parent=0
    #allocation2 [shape = 'u8[8192]{0}', space=vmem, size = 0x2000, scoped, tag = 'input window, operand 0']
    #allocation3 [shape = 's32[2]{0}', space=sflag, size = 0x8, scoped, tag = 'scoped memory for tpu_custom_call.1']
    #allocation4 [shape = 's32[2]{0}', space=sflag, size = 0x8, scoped, tag = 'scoped memory for tpu_custom_call.1']
    #allocation5 [shape = 'u8[8192]{0}', space=vmem, size = 0x2000, scoped, tag = 'output window, operand 0']
    %11 = vsyncpa [#allocation3], 0
    %s12 = scalar_lea.sflag [#allocation3], 1
    %13 = vsyncpa %s12, 0
    %14 = vsyncpa [#allocation4], 0
    %s15 = scalar_lea.sflag [#allocation4], 1
    %16 = vsyncpa %s15, 0
    loop: start=0, step=1, limit=4
    $region2: #{tpu_custom_call.1} parent=1 // loop_pre_header
      _
    $region3: #{tpu_custom_call.1} parent=1 // loop_header
      %s18 = sphi 0, %s22
      %p19 = scmp.ge.s32.totalorder %s18, 4
      %s28 = sphi 0, %s30
      %s31 = sphi 0, %s28
      %s32 = sphi 0, %s31
      %s48 = sphi 0, %s32
      %s52 = sphi 0, %s52
      %s54 = sphi 0, %s52
      %s55 = sphi 0, %s54
      %s69 = sphi 0, %s55
      %s73 = sphi 0, %s73
      %s75 = sphi 0, %s73
      %s76 = sphi 0, %s75
      %s90 = sphi 0, %s76
      %s94 = sphi 0, %s94
      %s96 = sphi 0, %s94
      %s97 = sphi 0, %s96
      %s111 = sphi 0, %s97
      %s115 = sphi 0, %s115
      %s117 = sphi 0, %s115
      %s118 = sphi 0, %s117
      %s132 = sphi 0, %s118
      %s136 = sphi 0, %s136
      %s138 = sphi 0, %s136
      %s139 = sphi 0, %s138
      %s153 = sphi 0, %s139
      %s159 = sphi 0, %s161
      %s162 = sphi 0, %s159
      %s163 = sphi 0, %s162
      %s179 = sphi 0, %s163
    $region4: #{tpu_custom_call.1} parent=1 // loop_header_branch
      %21 = sbr.rel (%p19) target = $region8
    $region5: #{tpu_custom_call.1} parent=1 // loop_body
      %s23 = ssub.s32 %s18, 1
      %s24 = ssub.s32 %s18, 2
      %s25 = sadd.s32 %s18, 1
      %s26 = ssub.s32 %s18, %s25
      %p27 = scmp.eq.s32.totalorder %s26, 0
      %s29 = sadd.s32 %s28, 1
      %s30 = scalar_select %p27, %s28, %s29
      %p33 = pneg %p27
      %p34 = scmp.eq.s32.totalorder %s18, 1
      %p35 = por %p33, %p34
      %p36 = scmp.ne.s32.totalorder %s28, %s31
      %p37 = scmp.eq.s32.totalorder %s18, 0
      %p38 = por %p36, %p37
      %p39 = scmp.ne.s32.totalorder %s28, %s31
      %p40 = scmp.eq.s32.totalorder %s23, 1
      %p41 = por %p39, %p40
      %p42 = scmp.ne.s32.totalorder %s31, %s32
      %p43 = scmp.eq.s32.totalorder %s23, 0
      %p44 = por %p42, %p43
      %p45 = scmp.ne.s32.totalorder %s31, %s32
      %p46 = scmp.eq.s32.totalorder %s24, 1
      %p47 = por %p45, %p46
      %p49 = scmp.ne.s32.totalorder %s32, %s48
      %p50 = scmp.eq.s32.totalorder %s24, 0
      %p51 = por %p49, %p50
      %s53 = sadd.s32 %s52, 1
      %p56 = scmp.eq.s32.totalorder %s18, 1
      %p57 = scmp.ne.s32.totalorder %s52, %s54
      %p58 = scmp.eq.s32.totalorder %s18, 0
      %p59 = por %p57, %p58
      %p60 = scmp.ne.s32.totalorder %s52, %s54
      %p61 = scmp.eq.s32.totalorder %s23, 1
      %p62 = por %p60, %p61
      %p63 = scmp.ne.s32.totalorder %s54, %s55
      %p64 = scmp.eq.s32.totalorder %s23, 0
      %p65 = por %p63, %p64
      %p66 = scmp.ne.s32.totalorder %s54, %s55
      %p67 = scmp.eq.s32.totalorder %s24, 1
      %p68 = por %p66, %p67
      %p70 = scmp.ne.s32.totalorder %s55, %s69
      %p71 = scmp.eq.s32.totalorder %s24, 0
      %p72 = por %p70, %p71
      %s74 = sadd.s32 %s73, 1
      %p77 = scmp.eq.s32.totalorder %s18, 1
      %p78 = scmp.ne.s32.totalorder %s73, %s75
      %p79 = scmp.eq.s32.totalorder %s18, 0
      %p80 = por %p78, %p79
      %p81 = scmp.ne.s32.totalorder %s73, %s75
      %p82 = scmp.eq.s32.totalorder %s23, 1
      %p83 = por %p81, %p82
      %p84 = scmp.ne.s32.totalorder %s75, %s76
      %p85 = scmp.eq.s32.totalorder %s23, 0
      %p86 = por %p84, %p85
      %p87 = scmp.ne.s32.totalorder %s75, %s76
      %p88 = scmp.eq.s32.totalorder %s24, 1
      %p89 = por %p87, %p88
      %p91 = scmp.ne.s32.totalorder %s76, %s90
      %p92 = scmp.eq.s32.totalorder %s24, 0
      %p93 = por %p91, %p92
      %s95 = sadd.s32 %s94, 1
      %p98 = scmp.eq.s32.totalorder %s18, 1
      %p99 = scmp.ne.s32.totalorder %s94, %s96
      %p100 = scmp.eq.s32.totalorder %s18, 0
      %p101 = por %p99, %p100
      %p102 = scmp.ne.s32.totalorder %s94, %s96
      %p103 = scmp.eq.s32.totalorder %s23, 1
      %p104 = por %p102, %p103
      %p105 = scmp.ne.s32.totalorder %s96, %s97
      %p106 = scmp.eq.s32.totalorder %s23, 0
      %p107 = por %p105, %p106
      %p108 = scmp.ne.s32.totalorder %s96, %s97
      %p109 = scmp.eq.s32.totalorder %s24, 1
      %p110 = por %p108, %p109
      %p112 = scmp.ne.s32.totalorder %s97, %s111
      %p113 = scmp.eq.s32.totalorder %s24, 0
      %p114 = por %p112, %p113
      %s116 = sadd.s32 %s115, 1
      %p119 = scmp.eq.s32.totalorder %s18, 1
      %p120 = scmp.ne.s32.totalorder %s115, %s117
      %p121 = scmp.eq.s32.totalorder %s18, 0
      %p122 = por %p120, %p121
      %p123 = scmp.ne.s32.totalorder %s115, %s117
      %p124 = scmp.eq.s32.totalorder %s23, 1
      %p125 = por %p123, %p124
      %p126 = scmp.ne.s32.totalorder %s117, %s118
      %p127 = scmp.eq.s32.totalorder %s23, 0
      %p128 = por %p126, %p127
      %p129 = scmp.ne.s32.totalorder %s117, %s118
      %p130 = scmp.eq.s32.totalorder %s24, 1
      %p131 = por %p129, %p130
      %p133 = scmp.ne.s32.totalorder %s118, %s132
      %p134 = scmp.eq.s32.totalorder %s24, 0
      %p135 = por %p133, %p134
      %s137 = sadd.s32 %s136, 1
      %p140 = scmp.eq.s32.totalorder %s18, 1
      %p141 = scmp.ne.s32.totalorder %s136, %s138
      %p142 = scmp.eq.s32.totalorder %s18, 0
      %p143 = por %p141, %p142
      %p144 = scmp.ne.s32.totalorder %s136, %s138
      %p145 = scmp.eq.s32.totalorder %s23, 1
      %p146 = por %p144, %p145
      %p147 = scmp.ne.s32.totalorder %s138, %s139
      %p148 = scmp.eq.s32.totalorder %s23, 0
      %p149 = por %p147, %p148
      %p150 = scmp.ne.s32.totalorder %s138, %s139
      %p151 = scmp.eq.s32.totalorder %s24, 1
      %p152 = por %p150, %p151
      %p154 = scmp.ne.s32.totalorder %s139, %s153
      %p155 = scmp.eq.s32.totalorder %s24, 0
      %p156 = por %p154, %p155
      %s157 = ssub.s32 %s18, %s25
      %p158 = scmp.eq.s32.totalorder %s157, 0
      %s160 = sadd.s32 %s159, 1
      %s161 = scalar_select %p158, %s159, %s160
      %p164 = pneg %p158
      %p165 = scmp.eq.s32.totalorder %s18, 1
      %p166 = por %p164, %p165
      %p167 = scmp.ne.s32.totalorder %s159, %s162
      %p168 = scmp.eq.s32.totalorder %s18, 0
      %p169 = por %p167, %p168
      %p170 = scmp.ne.s32.totalorder %s159, %s162
      %p171 = scmp.eq.s32.totalorder %s23, 1
      %p172 = por %p170, %p171
      %p173 = scmp.ne.s32.totalorder %s162, %s163
      %p174 = scmp.eq.s32.totalorder %s23, 0
      %p175 = por %p173, %p174
      %p176 = scmp.ne.s32.totalorder %s162, %s163
      %p177 = scmp.eq.s32.totalorder %s24, 1
      %p178 = por %p176, %p177
      %p180 = scmp.ne.s32.totalorder %s163, %s179
      %p181 = scmp.eq.s32.totalorder %s24, 0
      %p182 = por %p180, %p181
      %p183 = scmp.le.s32.totalorder 1, %s18
      %p184 = scmp.lt.s32.totalorder %s18, 3
      %p185 = pnand %p183, %p184
      %p186 = pneg %p185
      // Predicated region
      $region9: #{tpu_custom_call.1} parent=5 // pred_check
        _
      $region10: #{tpu_custom_call.1} parent=5 // pred_check_branch
        %188 = sbr.rel (%p185) target = $region12
      $region11: #{tpu_custom_call.1} parent=5 // pred_region
        %s189 = ssub.s32 %s18, 1
        // Predicated region
        $region13: #{tpu_custom_call.1} parent=11 // pred_check
          %p190 = pneg %p65
        $region14: #{tpu_custom_call.1} parent=11 // pred_check_branch
          %192 = sbr.rel (%p190) target = $region16
        $region15: #{tpu_custom_call.1} parent=11 // pred_region
          _
        $region16: #{tpu_custom_call.1} parent=11 // pred_fallthru
          _
        // Predicated region
        $region17: #{tpu_custom_call.1} parent=11 // pred_check
          %p193 = pneg %p86
        $region18: #{tpu_custom_call.1} parent=11 // pred_check_branch
          %195 = sbr.rel (%p193) target = $region20
        $region19: #{tpu_custom_call.1} parent=11 // pred_region
          _
        $region20: #{tpu_custom_call.1} parent=11 // pred_fallthru
          _
        // Predicated region
        $region21: #{tpu_custom_call.1} parent=11 // pred_check
          %p196 = pneg %p107
        $region22: #{tpu_custom_call.1} parent=11 // pred_check_branch
          %198 = sbr.rel (%p196) target = $region24
        $region23: #{tpu_custom_call.1} parent=11 // pred_region
          _
        $region24: #{tpu_custom_call.1} parent=11 // pred_fallthru
          _
        // Predicated region
        $region25: #{tpu_custom_call.1} parent=11 // pred_check
          %p199 = pneg %p128
        $region26: #{tpu_custom_call.1} parent=11 // pred_check_branch
          %201 = sbr.rel (%p199) target = $region28
        $region27: #{tpu_custom_call.1} parent=11 // pred_region
          _
        $region28: #{tpu_custom_call.1} parent=11 // pred_fallthru
          _
        // Predicated region
        $region29: #{tpu_custom_call.1} parent=11 // pred_check
          %p202 = pneg %p149
        $region30: #{tpu_custom_call.1} parent=11 // pred_check_branch
          %204 = sbr.rel (%p202) target = $region32
        $region31: #{tpu_custom_call.1} parent=11 // pred_region
          _
        $region32: #{tpu_custom_call.1} parent=11 // pred_fallthru
          _
      $region12: #{tpu_custom_call.1} parent=5 // pred_fallthru
        _
      %p205 = scmp.lt.s32.totalorder %s18, 2
      // Predicated region
      $region33: #{tpu_custom_call.1} parent=5 // pred_check
        %p206 = pneg %p205
      $region34: #{tpu_custom_call.1} parent=5 // pred_check_branch
        %208 = sbr.rel (%p206) target = $region36
      $region35: #{tpu_custom_call.1} parent=5 // pred_region
        // Predicated region
        $region37: #{tpu_custom_call.1} parent=35 // pred_check
          %p209 = pneg %p38
        $region38: #{tpu_custom_call.1} parent=35 // pred_check_branch
          %211 = sbr.rel (%p209) target = $region40
        $region39: #{tpu_custom_call.1} parent=35 // pred_region
          %s212 = sand.u32 %s28, 1
          %s213 = scalar_lea.sflag [#allocation3], %s212
          %s214 = sand.u32 %s28, 1
          %s215 = smul.addr %s214, 8
          %s216 = scalar_lea.vmem [#allocation2], %s215
          %218 = vsyncadd %s213, 0
          %s219 = smul.addr %s18, 2
          %s220 = smul.addr %s219, 4
          %s221 = scalar_lea.hbm %s0, %s220
          %s223 = sshll.u32 %s221, 4
          %s224 = int_to_ptr.hbm [resolvable:$true] %s223
          %s225 = sshll.u32 %s216, 4
          %s226 = int_to_ptr.vmem [resolvable:$true] %s225
          %228 = dma.hbm_to_vmem [thread:$0]  %s224, 128, %s226, %s213
        $region40: #{tpu_custom_call.1} parent=35 // pred_fallthru
          _
      $region36: #{tpu_custom_call.1} parent=5 // pred_fallthru
        _
      %p229 = scmp.le.s32.totalorder 1, %s18
      %p230 = scmp.lt.s32.totalorder %s18, 3
      %p231 = pnand %p229, %p230
      %p232 = pneg %p231
      // Predicated region
      $region41: #{tpu_custom_call.1} parent=5 // pred_check
        _
      $region42: #{tpu_custom_call.1} parent=5 // pred_check_branch
        %234 = sbr.rel (%p231) target = $region44
      $region43: #{tpu_custom_call.1} parent=5 // pred_region
        %s235 = ssub.s32 %s18, 1
        %s236 = sand.u32 %s31, 1
        %s237 = scalar_lea.sflag [#allocation3], %s236
        %s238 = sand.u32 %s31, 1
        %s239 = smul.addr %s238, 8
        %s240 = scalar_lea.vmem [#allocation2], %s239
        // Predicated region
        $region45: #{tpu_custom_call.1} parent=43 // pred_check
          %p241 = pneg %p44
        $region46: #{tpu_custom_call.1} parent=43 // pred_check_branch
          %243 = sbr.rel (%p241) target = $region48
        $region47: #{tpu_custom_call.1} parent=43 // pred_region
          %245 = dma.done %s237, 128
        $region48: #{tpu_custom_call.1} parent=43 // pred_fallthru
          _
        %s246 = sand.u32 %s31, 1
        %s247 = scalar_lea.sflag [#allocation3], %s246
        %s248 = sand.u32 %s31, 1
        %s249 = smul.addr %s248, 8
        %s250 = scalar_lea.vmem [#allocation2], %s249
        %p251 = pneg %p44
        %p252 = pneg %p41
        %p253 = pneg %p65
        %p254 = pneg %p62
        %p255 = pneg %p86
        %p256 = pneg %p83
        %p257 = pneg %p107
        %p258 = pneg %p104
        %p259 = pneg %p128
        %p260 = pneg %p125
        %p261 = pneg %p149
        %p262 = pneg %p146
        %p263 = pneg %p175
        %p264 = pneg %p172
        %s265 = sand.u32 %s162, 1
        %s266 = scalar_lea.sflag [#allocation4], %s265
        %s267 = sand.u32 %s162, 1
        %s268 = smul.addr %s267, 8
        %s269 = scalar_lea.vmem [#allocation5], %s268
        %v271 = vld [vmem:[%s240] sm:$0xff]
        %v272 = vld [vmem:[%s1] sm:$0x3]
        %v273 = vld [vmem:[%s3] sm:$0x3]
        %v274 = vld [vmem:[%s2] sm:$0xf]
        %v275 = vld [vmem:[%s4] sm:$0xf]
        %v276 = vld [vmem:[%s5] sm:$0x3]
        %v277 = vlaneseq
        %v278 = vand.u32 %v277, 127
        %v279 = vadd.s32 %v278, 128
        %vm280 = vcmp.eq.s32.totalorder %v276, 0
        %vm281 = vcmp.eq.s32.totalorder %v276, 15
        %vm282 = vcmp.lt.s32.totalorder %v278, 16
        %vm283 = vcmp.lt.s32.totalorder %v279, 16
        %vm284 = vcmp.ge.s32.totalorder %v278, 240
        %vm285 = vcmp.ge.s32.totalorder %v279, 240
        %287 = vst [vmem:[#allocation1] ss:$2 sm:$0xff] %v271
        %v288 = vld.sshfl [vmem:[#allocation1] sm:$0xff pattern:$0x75316420]
        %v289 = vld.sshfl [vmem:[#allocation1 + $0x8] sm:$0xff pattern:$0x75316420]
        %292 = vrot.lane.b32.xlu0 %v288, 127
        %v293 = vpop.permute.xlu0 %292
        %294 = vrot.lane.b32.xlu0 %v289, 127
        %v295 = vpop.permute.xlu0 %294
        %vm296 = vcmp.lt.s32.totalorder %v278, 127
        %v297 = vsel %vm296, %v293, %v295
        %v298 = vsel %vm296, %v295, %v293
        %299 = vst [vmem:[#allocation1] ss:$2 sm:$0xff] %v271
        %v300 = vld.sshfl [vmem:[#allocation1] sm:$0xff pattern:$0x75316420]
        %v301 = vld.sshfl [vmem:[#allocation1 + $0x8] sm:$0xff pattern:$0x75316420]
        %304 = vrot.lane.b32.xlu0 %v300, 1
        %v305 = vpop.permute.xlu0 %304
        %306 = vrot.lane.b32.xlu0 %v301, 1
        %v307 = vpop.permute.xlu0 %306
        %vm308 = vcmp.lt.s32.totalorder %v278, 1
        %v309 = vsel %vm308, %v305, %v307
        %v310 = vsel %vm308, %v307, %v305
        %v311 = vsel %vm280, 1, 0
        %v312 = vperm.slane %v311, 0
        %v313 = vperm.slane %v311, 1
        %vm314 = vcmp.eq.s32.totalorder %v312, 1
        %vm315 = vcmp.eq.s32.totalorder %v313, 1
        %v316 = vsel %vm314, %v297, %v310
        %v317 = vsel %vm315, %v298, %v309
        %v318 = vsel %vm281, 1, 0
        %v319 = vperm.slane %v318, 0
        %v320 = vperm.slane %v318, 1
        %vm321 = vcmp.eq.s32.totalorder %v319, 1
        %vm322 = vcmp.eq.s32.totalorder %v320, 1
        %v323 = vsel %vm321, %v310, %v297
        %v324 = vsel %vm322, %v309, %v298
        %325 = vrot.lane.b32.xlu0 %v316, 112
        %v326 = vpop.permute.xlu0 %325
        %327 = vrot.lane.b32.xlu0 %v317, 112
        %v328 = vpop.permute.xlu0 %327
        %vm329 = vcmp.lt.s32.totalorder %v278, 112
        %v330 = vsel %vm329, %v326, %v328
        %v331 = vsel %vm329, %v328, %v326
        %332 = vrot.lane.b32.xlu0 %v316, 16
        %v333 = vpop.permute.xlu0 %332
        %334 = vrot.lane.b32.xlu0 %v317, 16
        %v335 = vpop.permute.xlu0 %334
        %v336 = vsel %vm282, %v333, %v335
        %v337 = vsel %vm282, %v335, %v333
        %v338 = vsel %vm282, 1, 0
        %v339 = vsel %vm283, 1, 0
        %vm340 = vcmp.eq.s32.totalorder %v338, 1
        %vm341 = vcmp.eq.s32.totalorder %v339, 1
        %v342 = vsel %vm340, %v330, %v337
        %v343 = vsel %vm341, %v331, %v336
        %v344 = vsel %vm284, 1, 0
        %v345 = vsel %vm285, 1, 0
        %vm346 = vcmp.eq.s32.totalorder %v344, 1
        %vm347 = vcmp.eq.s32.totalorder %v345, 1
        %v348 = vsel %vm346, %v337, %v330
        %v349 = vsel %vm347, %v336, %v331
        %350 = vst [vmem:[#allocation1] ss:$2 sm:$0xff] %v271
        %v351 = vld.sshfl [vmem:[#allocation1] sm:$0xff pattern:$0x75316420]
        %v352 = vld.sshfl [vmem:[#allocation1 + $0x8] sm:$0xff pattern:$0x75316420]
        %355 = vrot.lane.b32.xlu0 %v351, 112
        %v356 = vpop.permute.xlu0 %355
        %357 = vrot.lane.b32.xlu0 %v352, 112
        %v358 = vpop.permute.xlu0 %357
        %v359 = vsel %vm329, %v356, %v358
        %v360 = vsel %vm329, %v358, %v356
        %361 = vst [vmem:[#allocation1] ss:$2 sm:$0xff] %v271
        %v362 = vld.sshfl [vmem:[#allocation1] sm:$0xff pattern:$0x75316420]
        %v363 = vld.sshfl [vmem:[#allocation1 + $0x8] sm:$0xff pattern:$0x75316420]
        %366 = vrot.lane.b32.xlu0 %v362, 16
        %v367 = vpop.permute.xlu0 %366
        %368 = vrot.lane.b32.xlu0 %v363, 16
        %v369 = vpop.permute.xlu0 %368
        %v370 = vsel %vm282, %v367, %v369
        %v371 = vsel %vm282, %v369, %v367
        %v372 = vsel %vm340, %v359, %v371
        %v373 = vsel %vm341, %v360, %v370
        %v374 = vsel %vm346, %v371, %v359
        %v375 = vsel %vm347, %v370, %v360
        %376 = vrot.lane.b32.xlu0 %v323, 112
        %v377 = vpop.permute.xlu0 %376
        %378 = vrot.lane.b32.xlu0 %v324, 112
        %v379 = vpop.permute.xlu0 %378
        %v380 = vsel %vm329, %v377, %v379
        %v381 = vsel %vm329, %v379, %v377
        %382 = vrot.lane.b32.xlu0 %v323, 16
        %v383 = vpop.permute.xlu0 %382
        %384 = vrot.lane.b32.xlu0 %v324, 16
        %v385 = vpop.permute.xlu0 %384
        %v386 = vsel %vm282, %v383, %v385
        %v387 = vsel %vm282, %v385, %v383
        %v388 = vsel %vm340, %v380, %v387
        %v389 = vsel %vm341, %v381, %v386
        %v390 = vsel %vm346, %v387, %v380
        %v391 = vsel %vm347, %v386, %v381
        %v394 = vrot.slane %v372, 4
        %v395 = vrot.slane %v373, 4
        %v400 = vrot.slane %v316, 4
        %v401 = vrot.slane %v317, 4
        %404 = vst [vmem:[#allocation1] ss:$2 sm:$0xff] %v271
        %v405 = vld.sshfl [vmem:[#allocation1] sm:$0xff pattern:$0x75316420]
        %v406 = vld.sshfl [vmem:[#allocation1 + $0x8] sm:$0xff pattern:$0x75316420]
        %v411 = vrot.slane %v323, 4
        %v412 = vrot.slane %v324, 4
        %v417 = vrot.slane %v374, 4
        %v418 = vrot.slane %v375, 4
        %vm421 = vcmask 1043456
        %v422 = vsel %vm421, %v342, %v394
        %v423 = vsel %vm421, %v343, %v395
        %v424 = vsel %vm421, %v388, %v400
        %v425 = vsel %vm421, %v389, %v401
        %v426 = vsel %vm421, %v405, %v411
        %v427 = vsel %vm421, %v406, %v412
        %v428 = vsel %vm421, %v348, %v417
        %v429 = vsel %vm421, %v349, %v418
        %v430 = vpack.c.bf16 %v424, %v422
        %v431 = vpack.c.bf16 %v425, %v423
        %v432 = vpack.c.bf16 %v428, %v426
        %v433 = vpack.c.bf16 %v429, %v427
        %v434 = vpack.c.bf16 %v390, %v390
        %v435 = vpack.c.bf16 %v391, %v391
        %437 = vset.pattern.permute.xlu0 0
        %438 = vperm.xlu0 %437, %v274
        %v439 = vpop.permute.xlu0 %438
        %vm441 = vcmask 293888
        %v443 = vsel %vm441, %v272, 0
        %vm445 = vcmask 1041408
        %v447 = vsel %vm445, %v434, 0
        %v450 = vsel %vm445, %v435, 0
        %452 = vmatpush.bf16.msra.mxu0 0
        %453 = vmatpush.bf16.msra.mxu0 0
        %454 = vmatpush.bf16.msra.mxu0 0
        %455 = vmatpush.bf16.msra.mxu0 0
        %456 = vmatpush.bf16.msra.mxu0 0
        %457 = vmatpush.bf16.msra.mxu0 %v447
        %458 = vmatpush.bf16.msra.mxu0 %v432
        %459 = vmatpush.bf16.msra.mxu0 %v430
        %460 = vmatmul.bf16.gmra.mxu0 %v443
        %v461 = vpop.f32.mrf.mxu0
        %v462 = vadd.f32 %v439, %v461
        %v463 = vpop.f32.mrf.mxu0
        %464 = vdwg.mxu0
        %465 = vmatpush.bf16.msra.mxu0 0
        %466 = vmatpush.bf16.msra.mxu0 0
        %467 = vmatpush.bf16.msra.mxu0 0
        %468 = vmatpush.bf16.msra.mxu0 0
        %469 = vmatpush.bf16.msra.mxu0 0
        %470 = vmatpush.bf16.msra.mxu0 %v450
        %471 = vmatpush.bf16.msra.mxu0 %v433
        %472 = vmatpush.bf16.msra.mxu0 %v431
        %473 = vmatmul.bf16.gmra.mxu0 %v443
        %v474 = vpop.f32.mrf.mxu0
        %v475 = vadd.f32 %v439, %v474
        %v476 = vpop.f32.mrf.mxu0
        %477 = vdwg.mxu0
        %v478 = vmul.f32 %v462, %v462
        %v479 = vmul.f32 %v475, %v475
        %v482 = vrot.slane %v478, 4
        %v483 = vrot.slane %v479, 4
        %v486 = vsel %vm421, %v462, %v482
        %v487 = vsel %vm421, %v475, %v483
        %v488 = vadd.f32 %v486, %v487
        %489 = vadd.xlane.f32.xlu0 %v488
        %v490 = vpop.xlane.xlu0 %489
        %v491 = vmul.f32 %v490, 0.00390625
        %v492 = vmul.f32 %v491, %v491
        %v494 = vrot.slane %v492, 4
        %v496 = vsub.f32 %v491, %v494
        %v497 = vsub.f32 %v462, %v491
        %v498 = vsub.f32 %v475, %v491
        %v499 = vadd.f32 %v496, 1e-05
        %v500 = vrsqrt.pop %v499
        %v501 = vmul.f32 %v500, %v499
        %v502 = vmul.f32 %v501, %v500
        %v503 = vmul.f32 0.5, %v502
        %v504 = vsub.f32 1.5, %v503
        %v505 = vmul.f32 %v500, %v504
        %vm506 = vweird.f32 %v499
        %vm507 = vweird.f32 %v500
        %vm508 = vmor %vm506, %vm507
        %v509 = vsel %vm508, %v500, %v505
        %511 = vset.pattern.permute.xlu0 0
        %512 = vperm.xlu0 %511, %v509
        %v513 = vpop.permute.xlu0 %512
        %v514 = vrot.slane %v513, 4
        %v516 = vmul.f32 %v497, %v514
        %v517 = vmul.f32 %v498, %v514
        %v518 = vmax.f32 %v516, 0.0
        %v519 = vmax.f32 %v517, 0.0
        %520 = vrot.lane.b32.xlu0 %v518, 127
        %v521 = vpop.permute.xlu0 %520
        %522 = vrot.lane.b32.xlu0 %v519, 127
        %v523 = vpop.permute.xlu0 %522
        %v524 = vsel %vm296, %v521, %v523
        %v525 = vsel %vm296, %v523, %v521
        %526 = vrot.lane.b32.xlu0 %v518, 1
        %v527 = vpop.permute.xlu0 %526
        %528 = vrot.lane.b32.xlu0 %v519, 1
        %v529 = vpop.permute.xlu0 %528
        %v530 = vsel %vm308, %v527, %v529
        %v531 = vsel %vm308, %v529, %v527
        %v532 = vsel %vm314, %v524, %v531
        %v533 = vsel %vm315, %v525, %v530
        %v534 = vsel %vm321, %v531, %v524
        %v535 = vsel %vm322, %v530, %v525
        %536 = vrot.lane.b32.xlu0 %v532, 112
        %v537 = vpop.permute.xlu0 %536
        %538 = vrot.lane.b32.xlu0 %v533, 112
        %v539 = vpop.permute.xlu0 %538
        %v540 = vsel %vm329, %v537, %v539
        %v541 = vsel %vm329, %v539, %v537
        %542 = vrot.lane.b32.xlu0 %v532, 16
        %v543 = vpop.permute.xlu0 %542
        %544 = vrot.lane.b32.xlu0 %v533, 16
        %v545 = vpop.permute.xlu0 %544
        %v546 = vsel %vm282, %v543, %v545
        %v547 = vsel %vm282, %v545, %v543
        %v548 = vsel %vm340, %v540, %v547
        %v549 = vsel %vm341, %v541, %v546
        %v550 = vsel %vm346, %v547, %v540
        %v551 = vsel %vm347, %v546, %v541
        %552 = vrot.lane.b32.xlu0 %v518, 112
        %v553 = vpop.permute.xlu0 %552
        %554 = vrot.lane.b32.xlu0 %v519, 112
        %v555 = vpop.permute.xlu0 %554
        %v556 = vsel %vm329, %v553, %v555
        %v557 = vsel %vm329, %v555, %v553
        %558 = vrot.lane.b32.xlu0 %v518, 16
        %v559 = vpop.permute.xlu0 %558
        %560 = vrot.lane.b32.xlu0 %v519, 16
        %v561 = vpop.permute.xlu0 %560
        %v562 = vsel %vm282, %v559, %v561
        %v563 = vsel %vm282, %v561, %v559
        %v564 = vsel %vm340, %v556, %v563
        %v565 = vsel %vm341, %v557, %v562
        %v566 = vsel %vm346, %v563, %v556
        %v567 = vsel %vm347, %v562, %v557
        %568 = vrot.lane.b32.xlu0 %v534, 112
        %v569 = vpop.permute.xlu0 %568
        %570 = vrot.lane.b32.xlu0 %v535, 112
        %v571 = vpop.permute.xlu0 %570
        %v572 = vsel %vm329, %v569, %v571
        %v573 = vsel %vm329, %v571, %v569
        %574 = vrot.lane.b32.xlu0 %v534, 16
        %v575 = vpop.permute.xlu0 %574
        %576 = vrot.lane.b32.xlu0 %v535, 16
        %v577 = vpop.permute.xlu0 %576
        %v578 = vsel %vm282, %v575, %v577
        %v579 = vsel %vm282, %v577, %v575
        %v580 = vsel %vm340, %v572, %v579
        %v581 = vsel %vm341, %v573, %v578
        %v582 = vsel %vm346, %v579, %v572
        %v583 = vsel %vm347, %v578, %v573
        %v586 = vrot.slane %v564, 4
        %v587 = vrot.slane %v565, 4
        %v592 = vrot.slane %v532, 4
        %v593 = vrot.slane %v533, 4
        %v598 = vrot.slane %v534, 4
        %v599 = vrot.slane %v535, 4
        %v604 = vrot.slane %v566, 4
        %v605 = vrot.slane %v567, 4
        %v608 = vsel %vm421, %v548, %v586
        %v609 = vsel %vm421, %v549, %v587
        %v610 = vsel %vm421, %v580, %v592
        %v611 = vsel %vm421, %v581, %v593
        %v612 = vsel %vm421, %v518, %v598
        %v613 = vsel %vm421, %v519, %v599
        %v614 = vsel %vm421, %v550, %v604
        %v615 = vsel %vm421, %v551, %v605
        %v616 = vpack.c.bf16 %v610, %v608
        %v617 = vpack.c.bf16 %v611, %v609
        %v618 = vpack.c.bf16 %v614, %v612
        %v619 = vpack.c.bf16 %v615, %v613
        %v620 = vpack.c.bf16 %v582, %v582
        %v621 = vpack.c.bf16 %v583, %v583
        %623 = vset.pattern.permute.xlu0 0
        %624 = vperm.xlu0 %623, %v275
        %v625 = vpop.permute.xlu0 %624
        %v628 = vsel %vm441, %v273, 0
        %v631 = vsel %vm445, %v620, 0
        %v634 = vsel %vm445, %v621, 0
        %636 = vmatpush.bf16.msra.mxu0 0
        %637 = vmatpush.bf16.msra.mxu0 0
        %638 = vmatpush.bf16.msra.mxu0 0
        %639 = vmatpush.bf16.msra.mxu0 0
        %640 = vmatpush.bf16.msra.mxu0 0
        %641 = vmatpush.bf16.msra.mxu0 %v631
        %642 = vmatpush.bf16.msra.mxu0 %v618
        %643 = vmatpush.bf16.msra.mxu0 %v616
        %644 = vmatmul.bf16.gmra.mxu0 %v628
        %v645 = vpop.f32.mrf.mxu0
        %v646 = vadd.f32 %v625, %v645
        %v647 = vpop.f32.mrf.mxu0
        %648 = vdwg.mxu0
        %649 = vmatpush.bf16.msra.mxu0 0
        %650 = vmatpush.bf16.msra.mxu0 0
        %651 = vmatpush.bf16.msra.mxu0 0
        %652 = vmatpush.bf16.msra.mxu0 0
        %653 = vmatpush.bf16.msra.mxu0 0
        %654 = vmatpush.bf16.msra.mxu0 %v634
        %655 = vmatpush.bf16.msra.mxu0 %v619
        %656 = vmatpush.bf16.msra.mxu0 %v617
        %657 = vmatmul.bf16.gmra.mxu0 %v628
        %v658 = vpop.f32.mrf.mxu0
        %v659 = vadd.f32 %v625, %v658
        %v660 = vpop.f32.mrf.mxu0
        %661 = vdwg.mxu0
        %v662 = vmul.f32 %v646, %v646
        %v663 = vmul.f32 %v659, %v659
        %v666 = vrot.slane %v662, 4
        %v667 = vrot.slane %v663, 4
        %v670 = vsel %vm421, %v646, %v666
        %v671 = vsel %vm421, %v659, %v667
        %v672 = vadd.f32 %v670, %v671
        %673 = vadd.xlane.f32.xlu0 %v672
        %v674 = vpop.xlane.xlu0 %673
        %v675 = vmul.f32 %v674, 0.00390625
        %v676 = vmul.f32 %v675, %v675
        %v678 = vrot.slane %v676, 4
        %v680 = vsub.f32 %v675, %v678
        %v681 = vsub.f32 %v646, %v675
        %v682 = vsub.f32 %v659, %v675
        %v683 = vadd.f32 %v680, 1e-05
        %v684 = vrsqrt.pop %v683
        %v685 = vmul.f32 %v684, %v683
        %v686 = vmul.f32 %v685, %v684
        %v687 = vmul.f32 0.5, %v686
        %v688 = vsub.f32 1.5, %v687
        %v689 = vmul.f32 %v684, %v688
        %vm690 = vweird.f32 %v683
        %vm691 = vweird.f32 %v684
        %vm692 = vmor %vm690, %vm691
        %v693 = vsel %vm692, %v684, %v689
        %695 = vset.pattern.permute.xlu0 0
        %696 = vperm.xlu0 %695, %v693
        %v697 = vpop.permute.xlu0 %696
        %v698 = vrot.slane %v697, 4
        %v700 = vmul.f32 %v681, %v698
        %v701 = vmul.f32 %v682, %v698
        %v704 = vrot.slane %v701, 4
        %v705 = vsel %vm421, %v700, %v704
        %v707 = vadd.f32 %v271, %v705
        %708 = vst [vmem:[%s269] sm:$0xff] %v707
        %s709 = sand.u32 %s162, 1
        %s710 = scalar_lea.sflag [#allocation4], %s709
        %s711 = sand.u32 %s162, 1
        %s712 = smul.addr %s711, 8
        %s713 = scalar_lea.vmem [#allocation5], %s712
        // Predicated region
        $region49: #{tpu_custom_call.1} parent=43 // pred_check
          %p714 = pneg %p172
        $region50: #{tpu_custom_call.1} parent=43 // pred_check_branch
          %716 = sbr.rel (%p714) target = $region52
        $region51: #{tpu_custom_call.1} parent=43 // pred_region
          %718 = vsyncadd %s710, 0
          %s719 = smul.addr %s23, 2
          %s720 = smul.addr %s719, 4
          %s721 = scalar_lea.hbm %s6, %s720
          %s723 = sshll.u32 %s713, 4
          %s724 = int_to_ptr.vmem [resolvable:$true] %s723
          %s725 = sshll.u32 %s721, 4
          %s726 = int_to_ptr.hbm [resolvable:$true] %s725
          %728 = dma.vmem_to_hbm [thread:$0]  %s724, 128, %s726, %s710
        $region52: #{tpu_custom_call.1} parent=43 // pred_fallthru
          _
      $region44: #{tpu_custom_call.1} parent=5 // pred_fallthru
        _
      %p729 = scmp.le.s32.totalorder 2, %s18
      // Predicated region
      $region53: #{tpu_custom_call.1} parent=5 // pred_check
        %p730 = pneg %p729
      $region54: #{tpu_custom_call.1} parent=5 // pred_check_branch
        %732 = sbr.rel (%p730) target = $region56
      $region55: #{tpu_custom_call.1} parent=5 // pred_region
        %s733 = ssub.s32 %s18, 2
        // Predicated region
        $region57: #{tpu_custom_call.1} parent=55 // pred_check
          %p734 = pneg %p178
        $region58: #{tpu_custom_call.1} parent=55 // pred_check_branch
          %736 = sbr.rel (%p734) target = $region60
        $region59: #{tpu_custom_call.1} parent=55 // pred_region
          %s737 = sand.u32 %s163, 1
          %s738 = scalar_lea.sflag [#allocation4], %s737
          %s739 = sand.u32 %s163, 1
          %s740 = smul.addr %s739, 8
          %s741 = scalar_lea.vmem [#allocation5], %s740
          %743 = dma.done %s738, 128
        $region60: #{tpu_custom_call.1} parent=55 // pred_fallthru
          _
      $region56: #{tpu_custom_call.1} parent=5 // pred_fallthru
        _
    $region6: #{tpu_custom_call.1} parent=1 // loop_footer
      %s22 = sadd.s32 1, %s18
    $region7: #{tpu_custom_call.1} parent=1 // loop_footer_branch
      %17 = sbr.rel target = $region3
    $region8: #{tpu_custom_call.1} parent=1 // loop_exit
      _
    %744 = vsyncpa [#allocation3], 1
    %s745 = scalar_lea.sflag [#allocation3], 1
    %746 = vsyncpa %s745, 1
    %747 = vsyncpa [#allocation4], 1
    %s748 = scalar_lea.sflag [#allocation4], 1
    %749 = vsyncpa %s748, 1

</llo_original>
